<compile_context>
chip_gen: v5e
topology: v5e:2x2
jax: 0.10.0
libtpu: 0.0.40
codegen_flags: <defaults>
</compile_context>

<pallas_src>
import jax
import jax.numpy as jnp
from jax.experimental import pallas as pl
from jax.experimental.pallas import tpu as pltpu

_LANES = 128
_MAX_TILE_ROWS = 2048  # 2048x128 f32 = 1 MiB per input block
# Divisor candidates (largest first) used to avoid whole-array padding.
_TILE_CANDIDATES = (2048, 1792, 1536, 1280, 1024, 896, 768, 640, 512, 384, 320, 256)


def _corr_loss_kernel(n_ref, x_ref, y_ref, out_ref,
                      sx_ref, sy_ref, sxx_ref, syy_ref, sxy_ref):
    # n_ref   : (1,) int32 in SMEM (scalar prefetch) -- true element count
    # x_ref   : (tile_r, 128) VMEM (f32 or bf16), zero padded past n
    # y_ref   : (tile_r, 128) VMEM
    # out_ref : (1, 1) f32 in SMEM -- the scalar loss
    # s*_ref  : (8, 128) f32 VMEM moment accumulators (persist across the grid)
    step = pl.program_id(0)

    @pl.when(step == 0)
    def _init():
        sx_ref[...] = jnp.zeros_like(sx_ref)
        sy_ref[...] = jnp.zeros_like(sy_ref)
        sxx_ref[...] = jnp.zeros_like(sxx_ref)
        syy_ref[...] = jnp.zeros_like(syy_ref)
        sxy_ref[...] = jnp.zeros_like(sxy_ref)

    x = x_ref[...].astype(jnp.float32)
    y = y_ref[...].astype(jnp.float32)
    tile_r = x.shape[0]
    xr = x.reshape(tile_r // 8, 8, _LANES)
    yr = y.reshape(tile_r // 8, 8, _LANES)

    # Leading-axis sums are elementwise vreg adds (VPU only); the cross-lane
    # reduction is deferred to the finalize step.
    sx_ref[...] += jnp.sum(xr, axis=0)
    sy_ref[...] += jnp.sum(yr, axis=0)
    sxx_ref[...] += jnp.sum(xr * xr, axis=0)
    syy_ref[...] += jnp.sum(yr * yr, axis=0)
    sxy_ref[...] += jnp.sum(xr * yr, axis=0)

    @pl.when(step == pl.num_programs(0) - 1)
    def _finalize():
        nf = n_ref[0].astype(jnp.float32)
        inv_n = 1.0 / nf
        # torch.std is unbiased (Bessel, / (n-1)); NaN for n == 1, same as torch.
        inv_nm1 = 1.0 / (nf - 1.0)

        s_x = jnp.sum(sx_ref[...])
        s_y = jnp.sum(sy_ref[...])
        s_xx = jnp.sum(sxx_ref[...])
        s_yy = jnp.sum(syy_ref[...])
        s_xy = jnp.sum(sxy_ref[...])

        mean_x = s_x * inv_n
        mean_y = s_y * inv_n
        # torch.mean((x - mx) * (y - my)) -> biased covariance (/ n).
        cov = s_xy * inv_n - mean_x * mean_y
        var_x = (s_xx - nf * mean_x * mean_x) * inv_nm1
        var_y = (s_yy - nf * mean_y * mean_y) * inv_nm1
        std_x = jnp.sqrt(jnp.maximum(var_x, 0.0))
        std_y = jnp.sqrt(jnp.maximum(var_y, 0.0))

        corr = cov / (std_x * std_y + jnp.float32(1e-5))
        out_ref[0, 0] = corr * corr


def _pick_tiling(n):
    """Return (tile_r, rows) with rows % tile_r == 0 and rows*128 >= n."""
    rows_raw = max(1, -(-n // _LANES))       # ceil(n / 128)
    rows8 = -(-rows_raw // 8) * 8            # minimal (8,128) alignment
    if rows8 <= _MAX_TILE_ROWS:
        return rows8, rows8                  # single full-array tile
    for cand in _TILE_CANDIDATES:            # divisor -> no extra row padding
        if rows8 % cand == 0:
            return cand, rows8
    tile_r = _MAX_TILE_ROWS                  # ragged: pad rows to a tile multiple
    rows = -(-rows8 // tile_r) * tile_r
    return tile_r, rows


@jax.jit
def correlation_coefficient_loss(y_true, y_pred):
    assert y_true.shape == y_pred.shape
    n = y_true.size
    assert 0 < n < 2**31, "element count must fit in int32"

    def _prep(v):
        v = v.reshape(-1)
        # Keep f32 / bf16 narrow through the DMA; upcast happens in-kernel.
        if v.dtype != jnp.float32 and v.dtype != jnp.bfloat16:
            v = v.astype(jnp.float32)
        return v

    x = _prep(y_true)
    y = _prep(y_pred)

    tile_r, rows = _pick_tiling(n)
    num_tiles = rows // tile_r
    padded = rows * _LANES

    def _to_slab(v):
        if padded > n:
            v = jnp.pad(v, (0, padded - n))  # zero pad: inert for raw moments
        return v.reshape(rows, _LANES)

    x2d = _to_slab(x)
    y2d = _to_slab(y)
    n_arr = jnp.array([n], dtype=jnp.int32)

    grid_spec = pltpu.PrefetchScalarGridSpec(
        num_scalar_prefetch=1,
        grid=(num_tiles,),
        in_specs=[
            pl.BlockSpec((tile_r, _LANES), lambda i, n_ref: (i, 0)),
            pl.BlockSpec((tile_r, _LANES), lambda i, n_ref: (i, 0)),
        ],
        out_specs=pl.BlockSpec(memory_space=pltpu.SMEM),
        scratch_shapes=[pltpu.VMEM((8, _LANES), jnp.float32)] * 5,
    )

    out = pl.pallas_call(
        _corr_loss_kernel,
        out_shape=jax.ShapeDtypeStruct((1, 1), jnp.float32),
        grid_spec=grid_spec,
        compiler_params=pltpu.CompilerParams(
            dimension_semantics=("arbitrary",)),
    )(n_arr, x2d, y2d)
    return out[0, 0]
    # TODO(synk): on v7x, a leading "parallel" axis over the two TensorCores
    # (partial moments combined in a tiny second step) would double HBM BW use
    # for very large inputs; single-core reduction kept here for simplicity.


def _reference(y_true, y_pred):
    x = y_true.reshape(-1).astype(jnp.float32)
    y = y_pred.reshape(-1).astype(jnp.float32)
    mx = jnp.mean(x)
    my = jnp.mean(y)
    cov = jnp.mean((x - mx) * (y - my))
    sx = jnp.std(x, ddof=1)
    sy = jnp.std(y, ddof=1)
    corr = cov / (sx * sy + 1e-5)
    return corr ** 2


if __name__ == "__main__":
    key = jax.random.PRNGKey(0)
    k1, k2 = jax.random.split(key)

    # Small NCHW-style inputs (the module takes generic tensors).
    y_true = jax.random.normal(k1, (2, 4, 16, 16), dtype=jnp.float32)
    # Make y_pred correlated with y_true so corr**2 is non-trivial.
    y_pred = 0.7 * y_true + 0.3 * jax.random.normal(k2, (2, 4, 16, 16), dtype=jnp.float32)

    loss = correlation_coefficient_loss(y_true, y_pred)
    loss = jax.block_until_ready(loss)
    ref = _reference(y_true, y_pred)
    assert jnp.allclose(loss, ref, rtol=1e-4, atol=1e-6), (loss, ref)

    # Multi-tile grid path (512*1024 elems -> 4096 rows -> 2 tiles of 2048, no pad).
    k3, k4 = jax.random.split(k2)
    big_true = jax.random.normal(k3, (512, 1024), dtype=jnp.float32)
    big_pred = 0.5 * big_true + 0.5 * jax.random.normal(k4, (512, 1024), dtype=jnp.float32)
    loss_big = jax.block_until_ready(correlation_coefficient_loss(big_true, big_pred))
    ref_big = _reference(big_true, big_pred)
    assert jnp.allclose(loss_big, ref_big, rtol=1e-4, atol=1e-6), (loss_big, ref_big)

    # Ragged size (3000 elems) -> exercises the zero-pad path.
    k5, k6 = jax.random.split(k4)
    rag_true = jax.random.normal(k5, (3, 1000), dtype=jnp.float32)
    rag_pred = 0.9 * rag_true + 0.1 * jax.random.normal(k6, (3, 1000), dtype=jnp.float32)
    loss_rag = jax.block_until_ready(correlation_coefficient_loss(rag_true, rag_pred))
    ref_rag = _reference(rag_true, rag_pred)
    assert jnp.allclose(loss_rag, ref_rag, rtol=1e-4, atol=1e-6), (loss_rag, ref_rag)

    print("KERNEL_OK")
</pallas_src>

<mosaic_0001>
module attributes {stable_mosaic.version = 11 : i64} {
  func.func @_corr_loss_kernel(%arg0: i32, %arg1: memref<1xi32, #tpu.memory_space<smem>>, %arg2: memref<16x128xf32, #tpu.memory_space<vmem>>, %arg3: memref<16x128xf32, #tpu.memory_space<vmem>>, %arg4: memref<1x1xf32, #tpu.memory_space<smem>>, %arg5: memref<8x128xf32, #tpu.memory_space<vmem>>, %arg6: memref<8x128xf32, #tpu.memory_space<vmem>>, %arg7: memref<8x128xf32, #tpu.memory_space<vmem>>, %arg8: memref<8x128xf32, #tpu.memory_space<vmem>>, %arg9: memref<8x128xf32, #tpu.memory_space<vmem>>) attributes {dimension_semantics = [#tpu.dimension_semantics<arbitrary>], iteration_bounds = array<i64: 1>, scalar_prefetch = 1 : i64, scratch_operands = 5 : i64, tpu.core_type = #tpu.core_type<tc>, window_params = [{transform_indices = @transform_0, window_bounds = array<i64: 16, 128>}, {transform_indices = @transform_1, window_bounds = array<i64: 16, 128>}, {transform_indices = @transform_2, window_bounds = array<i64: 1, 1>}]} {
    %c0_i32 = arith.constant 0 : i32
    %0 = arith.cmpi eq, %arg0, %c0_i32 : i32
    %1 = arith.extui %0 : i1 to i32
    %c0_i32_0 = arith.constant 0 : i32
    %2 = arith.cmpi ne, %1, %c0_i32_0 : i32
    scf.if %2 {
      %cst_30 = arith.constant 0.000000e+00 : f32
      %33 = vector.broadcast %cst_30 : f32 to vector<8x128xf32>
      %c0_31 = arith.constant 0 : index
      %c0_32 = arith.constant 0 : index
      %34 = vector.load %arg5[%c0_31, %c0_32] : memref<8x128xf32, #tpu.memory_space<vmem>>, vector<8x128xf32>
      tpu.vector_store %arg5[%c0_31, %c0_32], %33 {strides = array<i32>} : memref<8x128xf32, #tpu.memory_space<vmem>>, vector<8x128xf32>,
      %cst_33 = arith.constant 0.000000e+00 : f32
      %35 = vector.broadcast %cst_33 : f32 to vector<8x128xf32>
      %c0_34 = arith.constant 0 : index
      %c0_35 = arith.constant 0 : index
      %36 = vector.load %arg6[%c0_34, %c0_35] : memref<8x128xf32, #tpu.memory_space<vmem>>, vector<8x128xf32>
      tpu.vector_store %arg6[%c0_34, %c0_35], %35 {strides = array<i32>} : memref<8x128xf32, #tpu.memory_space<vmem>>, vector<8x128xf32>,
      %cst_36 = arith.constant 0.000000e+00 : f32
      %37 = vector.broadcast %cst_36 : f32 to vector<8x128xf32>
      %c0_37 = arith.constant 0 : index
      %c0_38 = arith.constant 0 : index
      %38 = vector.load %arg7[%c0_37, %c0_38] : memref<8x128xf32, #tpu.memory_space<vmem>>, vector<8x128xf32>
      tpu.vector_store %arg7[%c0_37, %c0_38], %37 {strides = array<i32>} : memref<8x128xf32, #tpu.memory_space<vmem>>, vector<8x128xf32>,
      %cst_39 = arith.constant 0.000000e+00 : f32
      %39 = vector.broadcast %cst_39 : f32 to vector<8x128xf32>
      %c0_40 = arith.constant 0 : index
      %c0_41 = arith.constant 0 : index
      %40 = vector.load %arg8[%c0_40, %c0_41] : memref<8x128xf32, #tpu.memory_space<vmem>>, vector<8x128xf32>
      tpu.vector_store %arg8[%c0_40, %c0_41], %39 {strides = array<i32>} : memref<8x128xf32, #tpu.memory_space<vmem>>, vector<8x128xf32>,
      %cst_42 = arith.constant 0.000000e+00 : f32
      %41 = vector.broadcast %cst_42 : f32 to vector<8x128xf32>
      %c0_43 = arith.constant 0 : index
      %c0_44 = arith.constant 0 : index
      %42 = vector.load %arg9[%c0_43, %c0_44] : memref<8x128xf32, #tpu.memory_space<vmem>>, vector<8x128xf32>
      tpu.vector_store %arg9[%c0_43, %c0_44], %41 {strides = array<i32>} : memref<8x128xf32, #tpu.memory_space<vmem>>, vector<8x128xf32>,
    } else {
    }
    %c0 = arith.constant 0 : index
    %c0_1 = arith.constant 0 : index
    %3 = vector.load %arg2[%c0, %c0_1] : memref<16x128xf32, #tpu.memory_space<vmem>>, vector<16x128xf32>
    %c0_2 = arith.constant 0 : index
    %c0_3 = arith.constant 0 : index
    %4 = vector.load %arg3[%c0_2, %c0_3] : memref<16x128xf32, #tpu.memory_space<vmem>>, vector<16x128xf32>
    %5 = vector.shape_cast %3 : vector<16x128xf32> to vector<2x8x128xf32>
    %6 = vector.shape_cast %4 : vector<16x128xf32> to vector<2x8x128xf32>
    %c0_4 = arith.constant 0 : index
    %c0_5 = arith.constant 0 : index
    %7 = vector.load %arg5[%c0_4, %c0_5] : memref<8x128xf32, #tpu.memory_space<vmem>>, vector<8x128xf32>
    %cst = arith.constant dense<0.000000e+00> : vector<8x128xf32>
    %8 = vector.multi_reduction <add>, %5, %cst [0] : vector<2x8x128xf32> to vector<8x128xf32>
    %9 = arith.addf %7, %8 : vector<8x128xf32>
    %c0_6 = arith.constant 0 : index
    %c0_7 = arith.constant 0 : index
    %10 = vector.load %arg5[%c0_6, %c0_7] : memref<8x128xf32, #tpu.memory_space<vmem>>, vector<8x128xf32>
    tpu.vector_store %arg5[%c0_6, %c0_7], %9 {strides = array<i32>} : memref<8x128xf32, #tpu.memory_space<vmem>>, vector<8x128xf32>,
    %c0_8 = arith.constant 0 : index
    %c0_9 = arith.constant 0 : index
    %11 = vector.load %arg6[%c0_8, %c0_9] : memref<8x128xf32, #tpu.memory_space<vmem>>, vector<8x128xf32>
    %cst_10 = arith.constant dense<0.000000e+00> : vector<8x128xf32>
    %12 = vector.multi_reduction <add>, %6, %cst_10 [0] : vector<2x8x128xf32> to vector<8x128xf32>
    %13 = arith.addf %11, %12 : vector<8x128xf32>
    %c0_11 = arith.constant 0 : index
    %c0_12 = arith.constant 0 : index
    %14 = vector.load %arg6[%c0_11, %c0_12] : memref<8x128xf32, #tpu.memory_space<vmem>>, vector<8x128xf32>
    tpu.vector_store %arg6[%c0_11, %c0_12], %13 {strides = array<i32>} : memref<8x128xf32, #tpu.memory_space<vmem>>, vector<8x128xf32>,
    %c0_13 = arith.constant 0 : index
    %c0_14 = arith.constant 0 : index
    %15 = vector.load %arg7[%c0_13, %c0_14] : memref<8x128xf32, #tpu.memory_space<vmem>>, vector<8x128xf32>
    %16 = arith.mulf %5, %5 : vector<2x8x128xf32>
    %cst_15 = arith.constant dense<0.000000e+00> : vector<8x128xf32>
    %17 = vector.multi_reduction <add>, %16, %cst_15 [0] : vector<2x8x128xf32> to vector<8x128xf32>
    %18 = arith.addf %15, %17 : vector<8x128xf32>
    %c0_16 = arith.constant 0 : index
    %c0_17 = arith.constant 0 : index
    %19 = vector.load %arg7[%c0_16, %c0_17] : memref<8x128xf32, #tpu.memory_space<vmem>>, vector<8x128xf32>
    tpu.vector_store %arg7[%c0_16, %c0_17], %18 {strides = array<i32>} : memref<8x128xf32, #tpu.memory_space<vmem>>, vector<8x128xf32>,
    %c0_18 = arith.constant 0 : index
    %c0_19 = arith.constant 0 : index
    %20 = vector.load %arg8[%c0_18, %c0_19] : memref<8x128xf32, #tpu.memory_space<vmem>>, vector<8x128xf32>
    %21 = arith.mulf %6, %6 : vector<2x8x128xf32>
    %cst_20 = arith.constant dense<0.000000e+00> : vector<8x128xf32>
    %22 = vector.multi_reduction <add>, %21, %cst_20 [0] : vector<2x8x128xf32> to vector<8x128xf32>
    %23 = arith.addf %20, %22 : vector<8x128xf32>
    %c0_21 = arith.constant 0 : index
    %c0_22 = arith.constant 0 : index
    %24 = vector.load %arg8[%c0_21, %c0_22] : memref<8x128xf32, #tpu.memory_space<vmem>>, vector<8x128xf32>
    tpu.vector_store %arg8[%c0_21, %c0_22], %23 {strides = array<i32>} : memref<8x128xf32, #tpu.memory_space<vmem>>, vector<8x128xf32>,
    %c0_23 = arith.constant 0 : index
    %c0_24 = arith.constant 0 : index
    %25 = vector.load %arg9[%c0_23, %c0_24] : memref<8x128xf32, #tpu.memory_space<vmem>>, vector<8x128xf32>
    %26 = arith.mulf %5, %6 : vector<2x8x128xf32>
    %cst_25 = arith.constant dense<0.000000e+00> : vector<8x128xf32>
    %27 = vector.multi_reduction <add>, %26, %cst_25 [0] : vector<2x8x128xf32> to vector<8x128xf32>
    %28 = arith.addf %25, %27 : vector<8x128xf32>
    %c0_26 = arith.constant 0 : index
    %c0_27 = arith.constant 0 : index
    %29 = vector.load %arg9[%c0_26, %c0_27] : memref<8x128xf32, #tpu.memory_space<vmem>>, vector<8x128xf32>
    tpu.vector_store %arg9[%c0_26, %c0_27], %28 {strides = array<i32>} : memref<8x128xf32, #tpu.memory_space<vmem>>, vector<8x128xf32>,
    %c0_i32_28 = arith.constant 0 : i32
    %30 = arith.cmpi eq, %arg0, %c0_i32_28 : i32
    %31 = arith.extui %30 : i1 to i32
    %c0_i32_29 = arith.constant 0 : i32
    %32 = arith.cmpi ne, %31, %c0_i32_29 : i32
    scf.if %32 {
      %c0_30 = arith.constant 0 : index
      %33 = memref.load %arg1[%c0_30] : memref<1xi32, #tpu.memory_space<smem>>
      %34 = arith.sitofp %33 : i32 to f32
      %cst_31 = arith.constant 1.000000e+00 : f32
      %35 = arith.divf %cst_31, %34 : f32
      %cst_32 = arith.constant 1.000000e+00 : f32
      %36 = arith.subf %34, %cst_32 : f32
      %cst_33 = arith.constant 1.000000e+00 : f32
      %37 = arith.divf %cst_33, %36 : f32
      %c0_34 = arith.constant 0 : index
      %c0_35 = arith.constant 0 : index
      %38 = vector.load %arg5[%c0_34, %c0_35] : memref<8x128xf32, #tpu.memory_space<vmem>>, vector<8x128xf32>
      %39 = vector.shape_cast %38 : vector<8x128xf32> to vector<1x8x128xf32>
      %cst_36 = arith.constant dense<0.000000e+00> : vector<1xf32>
      %40 = vector.multi_reduction <add>, %39, %cst_36 [1, 2] : vector<1x8x128xf32> to vector<1xf32>
      %41 = vector.shape_cast %40 : vector<1xf32> to vector<1x1x1xf32>
      %42 = vector.extract %41[0, 0, 0] : f32 from vector<1x1x1xf32>
      %c0_37 = arith.constant 0 : index
      %c0_38 = arith.constant 0 : index
      %43 = vector.load %arg6[%c0_37, %c0_38] : memref<8x128xf32, #tpu.memory_space<vmem>>, vector<8x128xf32>
      %44 = vector.shape_cast %43 : vector<8x128xf32> to vector<1x8x128xf32>
      %cst_39 = arith.constant dense<0.000000e+00> : vector<1xf32>
      %45 = vector.multi_reduction <add>, %44, %cst_39 [1, 2] : vector<1x8x128xf32> to vector<1xf32>
      %46 = vector.shape_cast %45 : vector<1xf32> to vector<1x1x1xf32>
      %47 = vector.extract %46[0, 0, 0] : f32 from vector<1x1x1xf32>
      %c0_40 = arith.constant 0 : index
      %c0_41 = arith.constant 0 : index
      %48 = vector.load %arg7[%c0_40, %c0_41] : memref<8x128xf32, #tpu.memory_space<vmem>>, vector<8x128xf32>
      %49 = vector.shape_cast %48 : vector<8x128xf32> to vector<1x8x128xf32>
      %cst_42 = arith.constant dense<0.000000e+00> : vector<1xf32>
      %50 = vector.multi_reduction <add>, %49, %cst_42 [1, 2] : vector<1x8x128xf32> to vector<1xf32>
      %51 = vector.shape_cast %50 : vector<1xf32> to vector<1x1x1xf32>
      %52 = vector.extract %51[0, 0, 0] : f32 from vector<1x1x1xf32>
      %c0_43 = arith.constant 0 : index
      %c0_44 = arith.constant 0 : index
      %53 = vector.load %arg8[%c0_43, %c0_44] : memref<8x128xf32, #tpu.memory_space<vmem>>, vector<8x128xf32>
      %54 = vector.shape_cast %53 : vector<8x128xf32> to vector<1x8x128xf32>
      %cst_45 = arith.constant dense<0.000000e+00> : vector<1xf32>
      %55 = vector.multi_reduction <add>, %54, %cst_45 [1, 2] : vector<1x8x128xf32> to vector<1xf32>
      %56 = vector.shape_cast %55 : vector<1xf32> to vector<1x1x1xf32>
      %57 = vector.extract %56[0, 0, 0] : f32 from vector<1x1x1xf32>
      %c0_46 = arith.constant 0 : index
      %c0_47 = arith.constant 0 : index
      %58 = vector.load %arg9[%c0_46, %c0_47] : memref<8x128xf32, #tpu.memory_space<vmem>>, vector<8x128xf32>
      %59 = vector.shape_cast %58 : vector<8x128xf32> to vector<1x8x128xf32>
      %cst_48 = arith.constant dense<0.000000e+00> : vector<1xf32>
      %60 = vector.multi_reduction <add>, %59, %cst_48 [1, 2] : vector<1x8x128xf32> to vector<1xf32>
      %61 = vector.shape_cast %60 : vector<1xf32> to vector<1x1x1xf32>
      %62 = vector.extract %61[0, 0, 0] : f32 from vector<1x1x1xf32>
      %63 = arith.mulf %42, %35 : f32
      %64 = arith.mulf %47, %35 : f32
      %65 = arith.mulf %62, %35 : f32
      %66 = arith.mulf %63, %64 : f32
      %67 = arith.subf %65, %66 : f32
      %68 = arith.mulf %34, %63 : f32
      %69 = arith.mulf %68, %63 : f32
      %70 = arith.subf %52, %69 : f32
      %71 = arith.mulf %70, %37 : f32
      %72 = arith.mulf %34, %64 : f32
      %73 = arith.mulf %72, %64 : f32
      %74 = arith.subf %57, %73 : f32
      %75 = arith.mulf %74, %37 : f32
      %cst_49 = arith.constant 0.000000e+00 : f32
      %76 = arith.maximumf %71, %cst_49 : f32
      %77 = math.sqrt %76 : f32
      %cst_50 = arith.constant 0.000000e+00 : f32
      %78 = arith.maximumf %75, %cst_50 : f32
      %79 = math.sqrt %78 : f32
      %80 = arith.mulf %77, %79 : f32
      %cst_51 = arith.constant 9.99999974E-6 : f32
      %81 = arith.addf %80, %cst_51 : f32
      %82 = arith.divf %67, %81 : f32
      %83 = arith.mulf %82, %82 : f32
      %c0_52 = arith.constant 0 : index
      %c0_53 = arith.constant 0 : index
      %84 = memref.load %arg4[%c0_52, %c0_53] : memref<1x1xf32, #tpu.memory_space<smem>>
      memref.store %83, %arg4[%c0_52, %c0_53] : memref<1x1xf32, #tpu.memory_space<smem>>
    } else {
    }
    return
  }
  func.func @transform_0(%arg0: i32, %arg1: memref<1xi32, #tpu.memory_space<smem>>) -> (i32, i32) {
    %c0_i32 = arith.constant 0 : i32
    %c0_i32_0 = arith.constant 0 : i32
    return %arg0, %c0_i32 : i32, i32
  }
  func.func @transform_1(%arg0: i32, %arg1: memref<1xi32, #tpu.memory_space<smem>>) -> (i32, i32) {
    %c0_i32 = arith.constant 0 : i32
    %c0_i32_0 = arith.constant 0 : i32
    return %arg0, %c0_i32 : i32, i32
  }
  func.func @transform_2(%arg0: i32, %arg1: memref<1xi32, #tpu.memory_space<smem>>) -> (i32, i32) {
    %c0_i32 = arith.constant 0 : i32
    %c0_i32_0 = arith.constant 0 : i32
    %c0_i32_1 = arith.constant 0 : i32
    return %c0_i32, %c0_i32_0 : i32, i32
  }
}

</mosaic_0001>

<llo_original>
// kernel: correlation_coefficient_loss.1
$region0: #{correlation_coefficient_loss.1}
  #allocation0 [shape = 'u32[]', space=smem, size = 0x4, offset = 0x4, fixed_abs, tag = 'smem constant byte address 0x4 - core index']
  #allocation1 [shape = 'u32[72,128]{1,0:T(1,128)}', space=vmem, size = 0x9000, scoped, tag = 'internal scratch']
  #allocation2 [shape = 'f32[8,128]{1,0:T(8,128)}', space=vmem, size = 0x1000, scoped, tag = 'scratch operand']
  #allocation3 [shape = 'f32[8,128]{1,0:T(8,128)}', space=vmem, size = 0x1000, scoped, tag = 'scratch operand']
  #allocation4 [shape = 'f32[8,128]{1,0:T(8,128)}', space=vmem, size = 0x1000, scoped, tag = 'scratch operand']
  #allocation5 [shape = 'f32[8,128]{1,0:T(8,128)}', space=vmem, size = 0x1000, scoped, tag = 'scratch operand']
  #allocation6 [shape = 'f32[8,128]{1,0:T(8,128)}', space=vmem, size = 0x1000, scoped, tag = 'scratch operand']
  #allocation7 [shape = 's32[1]{0}', space=sflag, size = 0x4, scoped, tag = 'scoped memory for correlation_coefficient_loss.1']
  #allocation8 [shape = 's32[1]{0:T(128)S(6)}', space=smem, size = 0x200, scoped, tag = 'prefetched SMEM operand 0']
  %s0 = inlined_call_operand.<no memory space> [shape: s32[1], index: 0, kind: input, shape index: {}]
  %s1 = inlined_call_operand.vmem [shape: f32[16,128], index: 1, kind: input, shape index: {}]
  %s2 = inlined_call_operand.vmem [shape: f32[16,128], index: 2, kind: input, shape index: {}]
  %s3 = inlined_call_operand.hbm [shape: f32[1,1], index: 3, kind: output, shape index: {}]
  %s4 = sld [smem:[#allocation0]]
  $region26: #{correlation_coefficient_loss.1} parent=0
    _
  %s6 = ssub.s32 1, %s4
  %s7 = scalar_select 0, %s6, %s4
  %8 = sst [smem:[#allocation8]] %s0
  $region1: #{correlation_coefficient_loss.1} parent=0
    #allocation9 [shape = 'u8[512]{0}', space=smem, size = 0x200, scoped, tag = 'output window, operand 0, single buffered']
    #allocation10 [shape = 's32[1]{0}', space=sflag, size = 0x4, scoped, tag = 'scoped memory for correlation_coefficient_loss.1']
    %9 = vsyncpa [#allocation10], 0
    // Predicated region
    $region2: #{correlation_coefficient_loss.1} parent=1 // pred_check
      _
    $region3: #{correlation_coefficient_loss.1} parent=1 // pred_check_branch
      %11 = sbr.rel (0) target = $region5
    $region4: #{correlation_coefficient_loss.1} parent=1 // pred_region
      _
    $region5: #{correlation_coefficient_loss.1} parent=1 // pred_fallthru
      _
    // Predicated region
    $region6: #{correlation_coefficient_loss.1} parent=1 // pred_check
      _
    $region7: #{correlation_coefficient_loss.1} parent=1 // pred_check_branch
      %13 = sbr.rel (0) target = $region9
    $region8: #{correlation_coefficient_loss.1} parent=1 // pred_region
      _
    $region9: #{correlation_coefficient_loss.1} parent=1 // pred_fallthru
      _
    %p14 = scmp.eq.s32.totalorder 0, 0
    // Predicated region
    $region10: #{correlation_coefficient_loss.1} parent=1 // pred_check
      %p15 = pneg %p14
    $region11: #{correlation_coefficient_loss.1} parent=1 // pred_check_branch
      %17 = sbr.rel (%p15) target = $region13
    $region12: #{correlation_coefficient_loss.1} parent=1 // pred_region
      %18 = vst [vmem:[#allocation2] sm:$0xff] 0.0
      %19 = vst [vmem:[#allocation3] sm:$0xff] 0.0
      %20 = vst [vmem:[#allocation4] sm:$0xff] 0.0
      %21 = vst [vmem:[#allocation5] sm:$0xff] 0.0
      %22 = vst [vmem:[#allocation6] sm:$0xff] 0.0
    $region13: #{correlation_coefficient_loss.1} parent=1 // pred_fallthru
      _
    %v23 = vld [vmem:[%s1] sm:$0xff]
    %v24 = vld [vmem:[%s1 + $0x8] sm:$0xff]
    %v25 = vld [vmem:[%s2] sm:$0xff]
    %v26 = vld [vmem:[%s2 + $0x8] sm:$0xff]
    %v27 = vld [vmem:[#allocation2] sm:$0xff]
    %v28 = vadd.f32 %v23, %v24
    %v29 = vadd.f32 %v27, %v28
    %30 = vst [vmem:[#allocation2] sm:$0xff] %v29
    %v31 = vld [vmem:[#allocation3] sm:$0xff]
    %v32 = vadd.f32 %v25, %v26
    %v33 = vadd.f32 %v31, %v32
    %34 = vst [vmem:[#allocation3] sm:$0xff] %v33
    %v35 = vld [vmem:[#allocation4] sm:$0xff]
    %v36 = vmul.f32 %v23, %v23
    %v37 = vmul.f32 %v24, %v24
    %v38 = vadd.f32 %v36, %v37
    %v39 = vadd.f32 %v35, %v38
    %40 = vst [vmem:[#allocation4] sm:$0xff] %v39
    %v41 = vld [vmem:[#allocation5] sm:$0xff]
    %v42 = vmul.f32 %v25, %v25
    %v43 = vmul.f32 %v26, %v26
    %v44 = vadd.f32 %v42, %v43
    %v45 = vadd.f32 %v41, %v44
    %46 = vst [vmem:[#allocation5] sm:$0xff] %v45
    %v47 = vld [vmem:[#allocation6] sm:$0xff]
    %v48 = vmul.f32 %v23, %v25
    %v49 = vmul.f32 %v24, %v26
    %v50 = vadd.f32 %v48, %v49
    %v51 = vadd.f32 %v47, %v50
    %52 = vst [vmem:[#allocation6] sm:$0xff] %v51
    // Predicated region
    $region14: #{correlation_coefficient_loss.1} parent=1 // pred_check
      %p53 = pneg %p14
    $region15: #{correlation_coefficient_loss.1} parent=1 // pred_check_branch
      %55 = sbr.rel (%p53) target = $region17
    $region16: #{correlation_coefficient_loss.1} parent=1 // pred_region
      %s56 = sld [smem:[#allocation8]]
      %s57 = scvt.s32.f32 %s56
      %v58 = vstv %s57
      %v59 = vrcp.pop %v58
      %v60 = vmul.f32 %v58, %v59
      %v61 = vsub.f32 1.0, %v60
      %v62 = vmul.f32 %v59, %v61
      %v63 = vadd.f32 %v59, %v62
      %vm64 = vweird.f32 %v58
      %vm65 = vweird.f32 %v59
      %vm66 = vmor %vm64, %vm65
      %v67 = vsel %vm66, %v59, %v63
      %v68 = vand.u32 2147483647, %v58
      %vm69 = vcmp.eq.f32.partialorder %v68, 8.507059e+37
      %v70 = vand.u32 %v58, 2147483648
      %v71 = vor.u32 1.1754944e-38, %v70
      %v72 = vsel %vm69, %v71, %v67
      %s73 = vtos %v72
      %s74 = ssub.f32 %s57, 1.0
      %v75 = vstv %s74
      %v76 = vrcp.pop %v75
      %v77 = vmul.f32 %v75, %v76
      %v78 = vsub.f32 1.0, %v77
      %v79 = vmul.f32 %v76, %v78
      %v80 = vadd.f32 %v76, %v79
      %vm81 = vweird.f32 %v75
      %vm82 = vweird.f32 %v76
      %vm83 = vmor %vm81, %vm82
      %v84 = vsel %vm83, %v76, %v80
      %v85 = vand.u32 2147483647, %v75
      %vm86 = vcmp.eq.f32.partialorder %v85, 8.507059e+37
      %v87 = vand.u32 %v75, 2147483648
      %v88 = vor.u32 1.1754944e-38, %v87
      %v89 = vsel %vm86, %v88, %v84
      %s90 = vtos %v89
      %v91 = vld [vmem:[#allocation2] sm:$0xff]
      %92 = vadd.xlane.f32.xlu0 %v91
      %v93 = vpop.xlane.xlu0 %92
      %v94 = vrot.slane %v93, 4
      %v95 = vadd.f32 %v93, %v94
      %v96 = vrot.slane %v95, 2
      %v97 = vadd.f32 %v95, %v96
      %v98 = vrot.slane %v97, 1
      %v99 = vadd.f32 %v97, %v98
      %s100 = vtos %v99
      %v101 = vld [vmem:[#allocation3] sm:$0xff]
      %102 = vadd.xlane.f32.xlu0 %v101
      %v103 = vpop.xlane.xlu0 %102
      %v104 = vrot.slane %v103, 4
      %v105 = vadd.f32 %v103, %v104
      %v106 = vrot.slane %v105, 2
      %v107 = vadd.f32 %v105, %v106
      %v108 = vrot.slane %v107, 1
      %v109 = vadd.f32 %v107, %v108
      %s110 = vtos %v109
      %v111 = vld [vmem:[#allocation4] sm:$0xff]
      %112 = vadd.xlane.f32.xlu0 %v111
      %v113 = vpop.xlane.xlu0 %112
      %v114 = vrot.slane %v113, 4
      %v115 = vadd.f32 %v113, %v114
      %v116 = vrot.slane %v115, 2
      %v117 = vadd.f32 %v115, %v116
      %v118 = vrot.slane %v117, 1
      %v119 = vadd.f32 %v117, %v118
      %s120 = vtos %v119
      %v121 = vld [vmem:[#allocation5] sm:$0xff]
      %122 = vadd.xlane.f32.xlu0 %v121
      %v123 = vpop.xlane.xlu0 %122
      %v124 = vrot.slane %v123, 4
      %v125 = vadd.f32 %v123, %v124
      %v126 = vrot.slane %v125, 2
      %v127 = vadd.f32 %v125, %v126
      %v128 = vrot.slane %v127, 1
      %v129 = vadd.f32 %v127, %v128
      %s130 = vtos %v129
      %v131 = vld [vmem:[#allocation6] sm:$0xff]
      %132 = vadd.xlane.f32.xlu0 %v131
      %v133 = vpop.xlane.xlu0 %132
      %v134 = vrot.slane %v133, 4
      %v135 = vadd.f32 %v133, %v134
      %v136 = vrot.slane %v135, 2
      %v137 = vadd.f32 %v135, %v136
      %v138 = vrot.slane %v137, 1
      %v139 = vadd.f32 %v137, %v138
      %s140 = vtos %v139
      %s141 = smul.f32 %s100, %s73
      %s142 = smul.f32 %s110, %s73
      %s143 = smul.f32 %s140, %s73
      %s144 = smul.f32 %s141, %s142
      %s145 = ssub.f32 %s143, %s144
      %s146 = smul.f32 %s57, %s141
      %s147 = smul.f32 %s146, %s141
      %s148 = ssub.f32 %s120, %s147
      %s149 = smul.f32 %s148, %s90
      %s150 = smul.f32 %s57, %s142
      %s151 = smul.f32 %s150, %s142
      %s152 = ssub.f32 %s130, %s151
      %s153 = smul.f32 %s152, %s90
      %s154 = smax.f32 %s149, 0.0
      %v155 = vstv %s154
      %v156 = vrsqrt.pop %v155
      %v157 = vmul.f32 %v156, %v155
      %v158 = vmul.f32 %v157, %v156
      %v159 = vmul.f32 0.5, %v158
      %v160 = vsub.f32 1.5, %v159
      %v161 = vmul.f32 %v156, %v160
      %v162 = vmul.f32 %v155, %v161
      %vm163 = vcmp.eq.f32.partialorder %v155, inf
      %v164 = vsel %vm163, %v155, %v162
      %vm165 = vcmp.eq.f32.partialorder %v155, 0.0
      %v166 = vand.u32 %v155, 2147483648
      %v167 = vsel %vm165, %v166, %v164
      %s168 = vtos %v167
      %s169 = smax.f32 %s153, 0.0
      %v170 = vstv %s169
      %v171 = vrsqrt.pop %v170
      %v172 = vmul.f32 %v171, %v170
      %v173 = vmul.f32 %v172, %v171
      %v174 = vmul.f32 0.5, %v173
      %v175 = vsub.f32 1.5, %v174
      %v176 = vmul.f32 %v171, %v175
      %v177 = vmul.f32 %v170, %v176
      %vm178 = vcmp.eq.f32.partialorder %v170, inf
      %v179 = vsel %vm178, %v170, %v177
      %vm180 = vcmp.eq.f32.partialorder %v170, 0.0
      %v181 = vand.u32 %v170, 2147483648
      %v182 = vsel %vm180, %v181, %v179
      %s183 = vtos %v182
      %s184 = smul.f32 %s168, %s183
      %s185 = sadd.f32 %s184, 1e-05
      %v186 = vstv %s185
      %v187 = vrcp.pop %v186
      %v188 = vmul.f32 %v186, %v187
      %v189 = vsub.f32 1.0, %v188
      %v190 = vmul.f32 %v187, %v189
      %v191 = vadd.f32 %v187, %v190
      %vm192 = vweird.f32 %v186
      %vm193 = vweird.f32 %v187
      %vm194 = vmor %vm192, %vm193
      %v195 = vsel %vm194, %v187, %v191
      %v196 = vand.u32 2147483647, %v186
      %vm197 = vcmp.eq.f32.partialorder %v196, 8.507059e+37
      %v198 = vand.u32 %v186, 2147483648
      %v199 = vor.u32 1.1754944e-38, %v198
      %v200 = vsel %vm197, %v199, %v195
      %s201 = vtos %v200
      %s202 = smul.f32 %s145, %s201
      %s203 = smul.f32 %s202, %s202
      %s204 = scalar_lea.smem [#allocation9], 0
      %205 = sst [smem:[%s204]] %s203
    $region17: #{correlation_coefficient_loss.1} parent=1 // pred_fallthru
      _
    // Predicated region
    $region18: #{correlation_coefficient_loss.1} parent=1 // pred_check
      _
    $region19: #{correlation_coefficient_loss.1} parent=1 // pred_check_branch
      %207 = sbr.rel (0) target = $region21
    $region20: #{correlation_coefficient_loss.1} parent=1 // pred_region
      %209 = vsyncadd [#allocation10], 0
      %s211 = sshll.u32 %s3, 4
      %s212 = int_to_ptr.hbm [resolvable:$true] %s211
      %214 = dma.smem_to_hbm [#allocation9], 16, %s212, [#allocation10]
    $region21: #{correlation_coefficient_loss.1} parent=1 // pred_fallthru
      _
    // Predicated region
    $region22: #{correlation_coefficient_loss.1} parent=1 // pred_check
      _
    $region23: #{correlation_coefficient_loss.1} parent=1 // pred_check_branch
      %216 = sbr.rel (0) target = $region25
    $region24: #{correlation_coefficient_loss.1} parent=1 // pred_region
      %218 = dma.done [#allocation10], 16
    $region25: #{correlation_coefficient_loss.1} parent=1 // pred_fallthru
      _
    %219 = sfence
    %220 = vsyncpa [#allocation10], 1

</llo_original>
